<compile_context>
chip_gen: v7x
topology: tpu7x:2x2x1
jax: 0.10.0
libtpu: 0.0.40
codegen_flags: <defaults>
</compile_context>

<pallas_src>
import jax
import jax.numpy as jnp
from jax.experimental import pallas as pl
from jax.experimental.pallas import tpu as pltpu


def _round_up(x, m):
    return (x + m - 1) // m * m


def _default_vmem_limit_bytes():
    """Scoped-VMEM limit per TPU generation (None -> keep compiler default)."""
    try:
        kind = jax.devices()[0].device_kind.lower()
    except Exception:
        return None
    if "v7" in kind:
        return 48 << 20        # 64 MiB physical per TensorCore: leave headroom
    if "v5" in kind or "v6" in kind:
        return 100 << 20       # 128 MiB physical VMEM
    return None


def _make_highway_kernel(resident):
    def kernel(x_ref, w_ref, b_ref, o_ref, state_ref):
        """One (row-tile, layer) grid step.

        x_ref:  (TN, Dp)                inputs (only consumed at layer 0)
        w_ref:  (L, Dp, 2Dp) resident | (Dp, 2Dp) streamed  fused [W_h.T|W_g.T]
        b_ref:  (L, 1, 2Dp)  resident | (1, 2Dp)  streamed  fused [b_h|b_g]
        o_ref:  (TN, Dp)                output block, x.dtype (written at last layer)
        state_ref: (TN, Dp) f32         running highway state (VMEM scratch)
        """
        layer = pl.program_id(1)
        d = o_ref.shape[-1]

        # First layer: seed the running state from the kernel input.
        @pl.when(layer == 0)
        def _():
            state_ref[...] = x_ref[...].astype(jnp.float32)

        cur = state_ref[...]                               # (TN, Dp) f32
        if resident:
            w = w_ref[layer]                               # (Dp, 2Dp)
            b = b_ref[layer]                               # (1, 2Dp)
        else:
            w = w_ref[...]
            b = b_ref[...]

        # Single fused MXU pass: proj = cur @ [W_h.T | W_g.T] -> (TN, 2Dp),
        # bf16 operands, f32 accumulation.
        proj = jnp.dot(cur.astype(w.dtype), w,
                       preferred_element_type=jnp.float32)
        proj = proj + b.astype(jnp.float32)                # f32 epilogue

        hidden = jnp.maximum(proj[:, :d], 0.0)             # relu(proj[:, :D])

        # sigmoid(g) = 1 / (1 + exp(-g)) without a full-precision divide:
        # EUP exp + approximate reciprocal + one Newton step (near-exact).
        g = jnp.maximum(proj[:, d:], -30.0)                # clamp: sigmoid(-30) ~ 1e-13
        y = 1.0 + jnp.exp(-g)
        r = pl.reciprocal(y, approx=True)
        gate = r * (2.0 - y * r)

        # gate*cur + (1-gate)*hidden  ==  hidden + gate*(cur - hidden)
        state_ref[...] = hidden + gate * (cur - hidden)

        # Last layer: write the HBM output once, already in x.dtype.
        @pl.when(layer == pl.num_programs(1) - 1)
        def _():
            o_ref[...] = state_ref[...].astype(o_ref.dtype)

    return kernel


def prepare_highway_params(weight, bias, *, weight_dtype=jnp.bfloat16):
    """Fuse per-layer nn.Linear(D, 2D) params into lane-dense kernel operands.

    weight: (L, 2D, D), bias: (L, 2D)
      -> w_fused: (L, Dp, 2Dp) weight_dtype, b_fused: (L, 1, 2Dp) f32.

    Hoist this out of the hot path: call once and reuse across forward calls.
    """
    L, twoD, D = weight.shape
    assert twoD == 2 * D
    Dp = max(_round_up(D, 128), 128)
    pad_d = Dp - D

    # Split Linear(D, 2D) into hidden / gate halves, transpose so the kernel
    # right-multiplies (proj = x @ W.T + b), zero-pad, fuse along lanes.
    w_h = jnp.transpose(weight[:, :D, :], (0, 2, 1))        # (L, D, D)
    w_g = jnp.transpose(weight[:, D:, :], (0, 2, 1))        # (L, D, D)
    w_h = jnp.pad(w_h, ((0, 0), (0, pad_d), (0, pad_d)))
    w_g = jnp.pad(w_g, ((0, 0), (0, pad_d), (0, pad_d)))
    w_fused = jnp.concatenate([w_h, w_g], axis=-1).astype(weight_dtype)

    b_h = jnp.pad(bias[:, :D], ((0, 0), (0, pad_d)))
    b_g = jnp.pad(bias[:, D:], ((0, 0), (0, pad_d)))
    b_fused = jnp.concatenate([b_h, b_g], axis=-1).astype(jnp.float32)
    return w_fused, b_fused[:, None, :]


def highway_apply(x, w_fused, b_fused, *, row_tile=256, vmem_limit_bytes=None):
    """Highway forward on pre-fused params.  x: (N, D) -> (N, D) in x.dtype."""
    N, D = x.shape
    L, Dp, twoDp = w_fused.shape

    vmem_limit = (vmem_limit_bytes if vmem_limit_bytes is not None
                  else _default_vmem_limit_bytes())
    vmem_budget = vmem_limit if vmem_limit is not None else (32 << 20)

    # Keep all L fused weight matrices VMEM-resident when they fit (single HBM
    # pass over the weights); otherwise stream one layer per grid step.
    # NOTE: for very large D on v7x, additionally add a K-tile (third grid
    # axis over Dp) / shrink row_tile so buffers fit the 64 MiB VMEM.
    w_bytes = L * Dp * twoDp * jnp.dtype(w_fused.dtype).itemsize
    resident = (2 * w_bytes) <= (vmem_budget // 2)

    n8 = max(_round_up(N, 8), 8)
    TN = min(_round_up(row_tile, 8), n8)
    if resident and n8 >= 16:
        # Guarantee >= 2 row tiles so both v7x TensorCores get work.
        TN = min(TN, _round_up((n8 + 1) // 2, 8))
    Np = _round_up(n8, TN)
    pad_d = Dp - D

    # Pad in native dtype -- no wrapper-side f32 upcast pass.
    x_p = jnp.pad(x, ((0, Np - N), (0, pad_d)))

    if resident:
        w_spec = pl.BlockSpec((L, Dp, twoDp), lambda i, l: (0, 0, 0))
        b_spec = pl.BlockSpec((L, 1, twoDp), lambda i, l: (0, 0, 0))
    else:
        w_spec = pl.BlockSpec((None, Dp, twoDp), lambda i, l: (l, 0, 0))
        b_spec = pl.BlockSpec((None, 1, twoDp), lambda i, l: (l, 0, 0))

    cp_kwargs = dict(dimension_semantics=("parallel", "arbitrary"))
    if vmem_limit is not None:
        cp_kwargs["vmem_limit_bytes"] = int(vmem_limit)

    out = pl.pallas_call(
        _make_highway_kernel(resident),
        out_shape=jax.ShapeDtypeStruct((Np, Dp), x.dtype),
        grid_spec=pltpu.PrefetchScalarGridSpec(
            num_scalar_prefetch=0,
            grid=(Np // TN, L),
            in_specs=[
                pl.BlockSpec((TN, Dp), lambda i, l: (i, 0)),   # x row tile
                w_spec,                                        # fused weights
                b_spec,                                        # fused bias
            ],
            out_specs=pl.BlockSpec((TN, Dp), lambda i, l: (i, 0)),
            scratch_shapes=[pltpu.VMEM((TN, Dp), jnp.float32)],
        ),
        compiler_params=pltpu.CompilerParams(**cp_kwargs),
    )(x_p, w_fused, b_fused)

    return out[:N, :D]


def highway_forward(x, weight, bias, **kwargs):
    """Convenience wrapper (fuses params per call; prefer hoisting
    prepare_highway_params out of the hot path)."""
    w_fused, b_fused = prepare_highway_params(weight, bias)
    return highway_apply(x, w_fused, b_fused, **kwargs)


def highway_reference(x, weight, bias, weight_dtype=jnp.bfloat16):
    """Pure-JAX reference mirroring the PyTorch forward (bf16 matmul,
    f32 state/epilogue, same as the kernel)."""
    D = x.shape[1]
    cur = x.astype(jnp.float32)
    for l in range(weight.shape[0]):
        w_t = weight[l].T.astype(weight_dtype)              # (D, 2D)
        proj = jnp.dot(cur.astype(weight_dtype), w_t,
                       preferred_element_type=jnp.float32) + bias[l]
        hidden = jnp.maximum(proj[:, :D], 0.0)
        gate = jax.nn.sigmoid(proj[:, D:])
        cur = gate * cur + (1.0 - gate) * hidden
    return cur.astype(x.dtype)


if __name__ == "__main__":
    N, D, L = 16, 128, 2   # batch=16, input_dim=128, num_layers=2

    key = jax.random.PRNGKey(0)
    kx, kw = jax.random.split(key)

    x = jax.random.normal(kx, (N, D), dtype=jnp.float32)

    # PyTorch-style params: Linear(D, 2D) weight (2D, D) ~ small normal;
    # bias zeros with the gate half filled with 1 (layer.bias[input_dim:] = 1).
    weight = 0.1 * jax.random.normal(kw, (L, 2 * D, D), dtype=jnp.float32)
    bias = jnp.concatenate(
        [jnp.zeros((L, D), jnp.float32), jnp.ones((L, D), jnp.float32)],
        axis=-1)

    # Param fusion hoisted out of the hot path; forward jitted once.
    w_fused, b_fused = prepare_highway_params(weight, bias)
    fwd = jax.jit(highway_apply)
    out = jax.block_until_ready(fwd(x, w_fused, b_fused))

    ref = highway_reference(x, weight, bias)
    if not jnp.allclose(out, ref, atol=1e-3, rtol=1e-3):
        raise AssertionError("Pallas highway output does not match reference")

    print("KERNEL_OK")
</pallas_src>

<mosaic_0001>
module attributes {stable_mosaic.version = 11 : i64} {
  func.func @kernel(%arg0: i32, %arg1: i32, %arg2: memref<8x128xf32, #tpu.memory_space<vmem>>, %arg3: memref<2x128x256xbf16, #tpu.memory_space<vmem>>, %arg4: memref<2x1x256xf32, #tpu.memory_space<vmem>>, %arg5: memref<8x128xf32, #tpu.memory_space<vmem>>, %arg6: memref<8x128xf32, #tpu.memory_space<vmem>>) attributes {dimension_semantics = [#tpu.dimension_semantics<parallel>, #tpu.dimension_semantics<arbitrary>], iteration_bounds = array<i64: 2, 2>, scalar_prefetch = 0 : i64, scratch_operands = 1 : i64, tpu.core_type = #tpu.core_type<tc>, window_params = [{transform_indices = @transform_0, window_bounds = array<i64: 8, 128>}, {pipeline_mode = #tpu.pipeline_mode<synchronous>, transform_indices = @transform_1, window_bounds = array<i64: 2, 128, 256>}, {pipeline_mode = #tpu.pipeline_mode<synchronous>, transform_indices = @transform_2, window_bounds = array<i64: 2, 1, 256>}, {transform_indices = @transform_3, window_bounds = array<i64: 8, 128>}]} {
    %c0_i32 = arith.constant 0 : i32
    %0 = arith.cmpi eq, %arg1, %c0_i32 : i32
    %1 = arith.extui %0 : i1 to i32
    %c0_i32_0 = arith.constant 0 : i32
    %2 = arith.cmpi ne, %1, %c0_i32_0 : i32
    scf.if %2 {
      %c0_14 = arith.constant 0 : index
      %c0_15 = arith.constant 0 : index
      %37 = vector.load %arg2[%c0_14, %c0_15] : memref<8x128xf32, #tpu.memory_space<vmem>>, vector<8x128xf32>
      %c0_16 = arith.constant 0 : index
      %c0_17 = arith.constant 0 : index
      %38 = vector.load %arg6[%c0_16, %c0_17] : memref<8x128xf32, #tpu.memory_space<vmem>>, vector<8x128xf32>
      tpu.vector_store %arg6[%c0_16, %c0_17], %37 {strides = array<i32>} : memref<8x128xf32, #tpu.memory_space<vmem>>, vector<8x128xf32>,
    } else {
    }
    %c0 = arith.constant 0 : index
    %c0_1 = arith.constant 0 : index
    %3 = vector.load %arg6[%c0, %c0_1] : memref<8x128xf32, #tpu.memory_space<vmem>>, vector<8x128xf32>
    %4 = arith.index_cast %arg1 : i32 to index
    %c0_2 = arith.constant 0 : index
    %c0_3 = arith.constant 0 : index
    %5 = vector.load %arg3[%4, %c0_2, %c0_3] : memref<2x128x256xbf16, #tpu.memory_space<vmem>>, vector<1x128x256xbf16>
    %6 = vector.shape_cast %5 : vector<1x128x256xbf16> to vector<128x256xbf16>
    %7 = arith.index_cast %arg1 : i32 to index
    %c0_4 = arith.constant 0 : index
    %c0_5 = arith.constant 0 : index
    %8 = vector.load %arg4[%7, %c0_4, %c0_5] : memref<2x1x256xf32, #tpu.memory_space<vmem>>, vector<1x1x256xf32>
    %9 = vector.shape_cast %8 : vector<1x1x256xf32> to vector<1x256xf32>
    %10 = arith.truncf %3 : vector<8x128xf32> to vector<8x128xbf16>
    %cst = arith.constant dense<0.000000e+00> : vector<8x256xf32>
    %11 = tpu.matmul %10, %6, %cst {dimension_numbers = #tpu.dot_dimension_numbers<[1], [0], [0], [1], [0, 0, 1, 1], [], []>} : vector<8x128xbf16>, vector<128x256xbf16>, vector<8x256xf32> -> vector<8x256xf32>
    %12 = vector.broadcast %9 : vector<1x256xf32> to vector<8x256xf32>
    %13 = arith.addf %11, %12 : vector<8x256xf32>
    %14 = vector.extract_strided_slice %13 {offsets = [0, 0], sizes = [8, 128], strides = [1, 1]} : vector<8x256xf32> to vector<8x128xf32>
    %cst_6 = arith.constant 0.000000e+00 : f32
    %15 = vector.broadcast %cst_6 : f32 to vector<8x128xf32>
    %16 = arith.maximumf %14, %15 : vector<8x128xf32>
    %17 = vector.extract_strided_slice %13 {offsets = [0, 128], sizes = [8, 128], strides = [1, 1]} : vector<8x256xf32> to vector<8x128xf32>
    %cst_7 = arith.constant -3.000000e+01 : f32
    %18 = vector.broadcast %cst_7 : f32 to vector<8x128xf32>
    %19 = arith.maximumf %17, %18 : vector<8x128xf32>
    %cst_8 = arith.constant 0.000000e+00 : f32
    %20 = vector.broadcast %cst_8 : f32 to vector<8x128xf32>
    %21 = arith.subf %20, %19 : vector<8x128xf32>
    %22 = math.exp %21 : vector<8x128xf32>
    %cst_9 = arith.constant 1.000000e+00 : f32
    %23 = vector.broadcast %cst_9 : f32 to vector<8x128xf32>
    %24 = arith.addf %23, %22 : vector<8x128xf32>
    %25 = tpu.reciprocal %24 {approx = true} : vector<8x128xf32> -> vector<8x128xf32>
    %26 = arith.mulf %24, %25 : vector<8x128xf32>
    %cst_10 = arith.constant 2.000000e+00 : f32
    %27 = vector.broadcast %cst_10 : f32 to vector<8x128xf32>
    %28 = arith.subf %27, %26 : vector<8x128xf32>
    %29 = arith.mulf %25, %28 : vector<8x128xf32>
    %30 = arith.subf %3, %16 : vector<8x128xf32>
    %31 = arith.mulf %29, %30 : vector<8x128xf32>
    %32 = arith.addf %16, %31 : vector<8x128xf32>
    %c0_11 = arith.constant 0 : index
    %c0_12 = arith.constant 0 : index
    %33 = vector.load %arg6[%c0_11, %c0_12] : memref<8x128xf32, #tpu.memory_space<vmem>>, vector<8x128xf32>
    tpu.vector_store %arg6[%c0_11, %c0_12], %32 {strides = array<i32>} : memref<8x128xf32, #tpu.memory_space<vmem>>, vector<8x128xf32>,
    %c1_i32 = arith.constant 1 : i32
    %34 = arith.cmpi eq, %arg1, %c1_i32 : i32
    %35 = arith.extui %34 : i1 to i32
    %c0_i32_13 = arith.constant 0 : i32
    %36 = arith.cmpi ne, %35, %c0_i32_13 : i32
    scf.if %36 {
      %c0_14 = arith.constant 0 : index
      %c0_15 = arith.constant 0 : index
      %37 = vector.load %arg6[%c0_14, %c0_15] : memref<8x128xf32, #tpu.memory_space<vmem>>, vector<8x128xf32>
      %c0_16 = arith.constant 0 : index
      %c0_17 = arith.constant 0 : index
      %38 = vector.load %arg5[%c0_16, %c0_17] : memref<8x128xf32, #tpu.memory_space<vmem>>, vector<8x128xf32>
      tpu.vector_store %arg5[%c0_16, %c0_17], %37 {strides = array<i32>} : memref<8x128xf32, #tpu.memory_space<vmem>>, vector<8x128xf32>,
    } else {
    }
    return
  }
  func.func @transform_0(%arg0: i32, %arg1: i32) -> (i32, i32) {
    %c0_i32 = arith.constant 0 : i32
    %c0_i32_0 = arith.constant 0 : i32
    return %arg0, %c0_i32 : i32, i32
  }
  func.func @transform_1(%arg0: i32, %arg1: i32) -> (i32, i32, i32) {
    %c0_i32 = arith.constant 0 : i32
    %c0_i32_0 = arith.constant 0 : i32
    %c0_i32_1 = arith.constant 0 : i32
    %c0_i32_2 = arith.constant 0 : i32
    return %c0_i32, %c0_i32_0, %c0_i32_1 : i32, i32, i32
  }
  func.func @transform_2(%arg0: i32, %arg1: i32) -> (i32, i32, i32) {
    %c0_i32 = arith.constant 0 : i32
    %c0_i32_0 = arith.constant 0 : i32
    %c0_i32_1 = arith.constant 0 : i32
    %c0_i32_2 = arith.constant 0 : i32
    return %c0_i32, %c0_i32_0, %c0_i32_1 : i32, i32, i32
  }
  func.func @transform_3(%arg0: i32, %arg1: i32) -> (i32, i32) {
    %c0_i32 = arith.constant 0 : i32
    %c0_i32_0 = arith.constant 0 : i32
    return %arg0, %c0_i32 : i32, i32
  }
}

</mosaic_0001>

<llo_original>
// kernel: highway_apply.1
$region0: #{highway_apply.1}
  #allocation0 [shape = 'u32[]', space=smem, size = 0x4, offset = 0x4, fixed_abs, tag = 'smem constant byte address 0x4 - core index']
  #allocation1 [shape = 'u32[144,128]{1,0:T(1,128)}', space=vmem, size = 0x12000, scoped, tag = 'internal scratch']
  #allocation2 [shape = 'f32[8,128]{1,0:T(8,128)}', space=vmem, size = 0x1000, scoped, tag = 'scratch operand']
  %s0 = inlined_call_operand.hbm [shape: f32[16,128], index: 0, kind: input, shape index: {}]
  %s1 = inlined_call_operand.hbm [shape: bf16[2,128,256], index: 1, kind: input, shape index: {}]
  %s2 = inlined_call_operand.vmem [shape: f32[2,1,256], index: 2, kind: input, shape index: {}]
  %s3 = inlined_call_operand.hbm [shape: f32[16,128], index: 3, kind: output, shape index: {}]
  %s4 = sld [smem:[#allocation0]]
  $region61: #{highway_apply.1} parent=0
    _
  %s6 = ssub.s32 1, %s4
  %s7 = scalar_select 0, %s6, %s4
  $region1: #{highway_apply.1} parent=0
    #allocation3 [shape = 'u8[8192]{0}', space=vmem, size = 0x2000, scoped, tag = 'input window, operand 0']
    #allocation4 [shape = 's32[2]{0}', space=sflag, size = 0x8, scoped, tag = 'scoped memory for highway_apply.1']
    #allocation5 [shape = 's32[2]{0}', space=sflag, size = 0x8, scoped, tag = 'scoped memory for highway_apply.1']
    #allocation6 [shape = 'u8[131072]{0}', space=vmem, size = 0x20000, scoped, tag = 'input window, operand 1, single buffered']
    #allocation7 [shape = 's32[1]{0}', space=sflag, size = 0x4, scoped, tag = 'scoped memory for highway_apply.1']
    #allocation8 [shape = 'u8[8192]{0}', space=vmem, size = 0x2000, scoped, tag = 'output window, operand 0']
    %8 = vsyncpa [#allocation4], 0
    %s9 = scalar_lea.sflag [#allocation4], 1
    %10 = vsyncpa %s9, 0
    %11 = vsyncpa [#allocation7], 0
    %12 = vsyncpa [#allocation5], 0
    %s13 = scalar_lea.sflag [#allocation5], 1
    %14 = vsyncpa %s13, 0
    loop: start=0, step=1, limit=6
    $region2: #{highway_apply.1} parent=1 // loop_pre_header
      _
    $region3: #{highway_apply.1} parent=1 // loop_header
      %s16 = sphi 0, %s20
      %p17 = scmp.ge.s32.totalorder %s16, 6
      %s23 = sphi 0, %s35
      %s24 = sphi 0, %s31
      %s25 = sphi 0, %s23
      %s26 = sphi 0, %s24
      %s27 = sphi 0, %s25
      %s28 = sphi 0, %s26
      %s38 = sphi 0, %s40
      %s41 = sphi 0, %s38
      %s42 = sphi 0, %s41
      %s58 = sphi 0, %s42
      %s62 = sphi 0, %s62
      %s64 = sphi 0, %s62
      %s65 = sphi 0, %s64
      %s79 = sphi 0, %s65
      %s83 = sphi 0, %s83
      %s85 = sphi 0, %s83
      %s86 = sphi 0, %s85
      %s100 = sphi 0, %s86
      %s106 = sphi 0, %s108
      %s109 = sphi 0, %s106
      %s110 = sphi 0, %s109
      %s126 = sphi 0, %s110
    $region4: #{highway_apply.1} parent=1 // loop_header_branch
      %19 = sbr.rel (%p17) target = $region8
    $region5: #{highway_apply.1} parent=1 // loop_body
      %s21 = ssub.s32 %s16, 1
      %s22 = ssub.s32 %s16, 2
      %s29 = sadd.s32 1, %s24
      %p30 = scmp.ge.s32.totalorder %s29, 2
      %s31 = scalar_select %p30, 0, %s29
      %s32 = sadd.s32 1, %s23
      %s33 = scalar_select %p30, %s32, %s23
      %p34 = scmp.ge.s32.totalorder %s33, 2
      %s35 = scalar_select %p34, 0, %s33
      %s36 = ssub.s32 %s23, %s35
      %p37 = scmp.eq.s32.totalorder %s36, 0
      %s39 = sadd.s32 %s38, 1
      %s40 = scalar_select %p37, %s38, %s39
      %p43 = pneg %p37
      %p44 = scmp.eq.s32.totalorder %s16, 3
      %p45 = por %p43, %p44
      %p46 = scmp.ne.s32.totalorder %s38, %s41
      %p47 = scmp.eq.s32.totalorder %s16, 0
      %p48 = por %p46, %p47
      %p49 = scmp.ne.s32.totalorder %s38, %s41
      %p50 = scmp.eq.s32.totalorder %s21, 3
      %p51 = por %p49, %p50
      %p52 = scmp.ne.s32.totalorder %s41, %s42
      %p53 = scmp.eq.s32.totalorder %s21, 0
      %p54 = por %p52, %p53
      %p55 = scmp.ne.s32.totalorder %s41, %s42
      %p56 = scmp.eq.s32.totalorder %s22, 3
      %p57 = por %p55, %p56
      %p59 = scmp.ne.s32.totalorder %s42, %s58
      %p60 = scmp.eq.s32.totalorder %s22, 0
      %p61 = por %p59, %p60
      %s63 = sadd.s32 %s62, 1
      %p66 = scmp.eq.s32.totalorder %s16, 3
      %p67 = scmp.ne.s32.totalorder %s62, %s64
      %p68 = scmp.eq.s32.totalorder %s16, 0
      %p69 = por %p67, %p68
      %p70 = scmp.ne.s32.totalorder %s62, %s64
      %p71 = scmp.eq.s32.totalorder %s21, 3
      %p72 = por %p70, %p71
      %p73 = scmp.ne.s32.totalorder %s64, %s65
      %p74 = scmp.eq.s32.totalorder %s21, 0
      %p75 = por %p73, %p74
      %p76 = scmp.ne.s32.totalorder %s64, %s65
      %p77 = scmp.eq.s32.totalorder %s22, 3
      %p78 = por %p76, %p77
      %p80 = scmp.ne.s32.totalorder %s65, %s79
      %p81 = scmp.eq.s32.totalorder %s22, 0
      %p82 = por %p80, %p81
      %s84 = sadd.s32 %s83, 1
      %p87 = scmp.eq.s32.totalorder %s16, 3
      %p88 = scmp.ne.s32.totalorder %s83, %s85
      %p89 = scmp.eq.s32.totalorder %s16, 0
      %p90 = por %p88, %p89
      %p91 = scmp.ne.s32.totalorder %s83, %s85
      %p92 = scmp.eq.s32.totalorder %s21, 3
      %p93 = por %p91, %p92
      %p94 = scmp.ne.s32.totalorder %s85, %s86
      %p95 = scmp.eq.s32.totalorder %s21, 0
      %p96 = por %p94, %p95
      %p97 = scmp.ne.s32.totalorder %s85, %s86
      %p98 = scmp.eq.s32.totalorder %s22, 3
      %p99 = por %p97, %p98
      %p101 = scmp.ne.s32.totalorder %s86, %s100
      %p102 = scmp.eq.s32.totalorder %s22, 0
      %p103 = por %p101, %p102
      %s104 = ssub.s32 %s23, %s35
      %p105 = scmp.eq.s32.totalorder %s104, 0
      %s107 = sadd.s32 %s106, 1
      %s108 = scalar_select %p105, %s106, %s107
      %p111 = pneg %p105
      %p112 = scmp.eq.s32.totalorder %s16, 3
      %p113 = por %p111, %p112
      %p114 = scmp.ne.s32.totalorder %s106, %s109
      %p115 = scmp.eq.s32.totalorder %s16, 0
      %p116 = por %p114, %p115
      %p117 = scmp.ne.s32.totalorder %s106, %s109
      %p118 = scmp.eq.s32.totalorder %s21, 3
      %p119 = por %p117, %p118
      %p120 = scmp.ne.s32.totalorder %s109, %s110
      %p121 = scmp.eq.s32.totalorder %s21, 0
      %p122 = por %p120, %p121
      %p123 = scmp.ne.s32.totalorder %s109, %s110
      %p124 = scmp.eq.s32.totalorder %s22, 3
      %p125 = por %p123, %p124
      %p127 = scmp.ne.s32.totalorder %s110, %s126
      %p128 = scmp.eq.s32.totalorder %s22, 0
      %p129 = por %p127, %p128
      %p130 = scmp.le.s32.totalorder 1, %s16
      %p131 = scmp.lt.s32.totalorder %s16, 5
      %p132 = pnand %p130, %p131
      %p133 = pneg %p132
      // Predicated region
      $region9: #{highway_apply.1} parent=5 // pred_check
        _
      $region10: #{highway_apply.1} parent=5 // pred_check_branch
        %135 = sbr.rel (%p132) target = $region12
      $region11: #{highway_apply.1} parent=5 // pred_region
        %s136 = ssub.s32 %s16, 1
        // Predicated region
        $region13: #{highway_apply.1} parent=11 // pred_check
          %p137 = pneg %p75
        $region14: #{highway_apply.1} parent=11 // pred_check_branch
          %139 = sbr.rel (%p137) target = $region16
        $region15: #{highway_apply.1} parent=11 // pred_region
          %s141 = ssub.s32 4096, 4096
          %142 = vsyncadd [#allocation7], %s141
          %s143 = sshll.u32 [#allocation6], 4
          %s144 = int_to_ptr.vmem [resolvable:$true] %s143
          %149 = dma.hbm_to_vmem [thread:$0]  %s1, 4096, %s144, [#allocation7], 128, 128, 8
        $region16: #{highway_apply.1} parent=11 // pred_fallthru
          _
        // Predicated region
        $region17: #{highway_apply.1} parent=11 // pred_check
          %p150 = pneg %p96
        $region18: #{highway_apply.1} parent=11 // pred_check_branch
          %152 = sbr.rel (%p150) target = $region20
        $region19: #{highway_apply.1} parent=11 // pred_region
          _
        $region20: #{highway_apply.1} parent=11 // pred_fallthru
          _
      $region12: #{highway_apply.1} parent=5 // pred_fallthru
        _
      %p153 = scmp.lt.s32.totalorder %s16, 4
      // Predicated region
      $region21: #{highway_apply.1} parent=5 // pred_check
        %p154 = pneg %p153
      $region22: #{highway_apply.1} parent=5 // pred_check_branch
        %156 = sbr.rel (%p154) target = $region24
      $region23: #{highway_apply.1} parent=5 // pred_region
        // Predicated region
        $region25: #{highway_apply.1} parent=23 // pred_check
          %p157 = pneg %p48
        $region26: #{highway_apply.1} parent=23 // pred_check_branch
          %159 = sbr.rel (%p157) target = $region28
        $region27: #{highway_apply.1} parent=23 // pred_region
          %s160 = sand.u32 %s38, 1
          %s161 = scalar_lea.sflag [#allocation4], %s160
          %s162 = sand.u32 %s38, 1
          %s163 = smul.addr %s162, 8
          %s164 = scalar_lea.vmem [#allocation3], %s163
          %s166 = ssub.s32 128, 128
          %167 = vsyncadd %s161, %s166
          %s168 = smul.addr %s23, 128
          %s169 = scalar_lea.hbm %s0, %s168
          %s171 = sshll.u32 %s164, 4
          %s172 = int_to_ptr.vmem [resolvable:$true] %s171
          %174 = dma.hbm_to_vmem [thread:$0]  %s169, 128, %s172, %s161
        $region28: #{highway_apply.1} parent=23 // pred_fallthru
          _
      $region24: #{highway_apply.1} parent=5 // pred_fallthru
        _
      %p175 = scmp.le.s32.totalorder 1, %s16
      %p176 = scmp.lt.s32.totalorder %s16, 5
      %p177 = pnand %p175, %p176
      %p178 = pneg %p177
      // Predicated region
      $region29: #{highway_apply.1} parent=5 // pred_check
        _
      $region30: #{highway_apply.1} parent=5 // pred_check_branch
        %180 = sbr.rel (%p177) target = $region32
      $region31: #{highway_apply.1} parent=5 // pred_region
        %s181 = ssub.s32 %s16, 1
        %s182 = sand.u32 %s41, 1
        %s183 = scalar_lea.sflag [#allocation4], %s182
        %s184 = sand.u32 %s41, 1
        %s185 = smul.addr %s184, 8
        %s186 = scalar_lea.vmem [#allocation3], %s185
        // Predicated region
        $region33: #{highway_apply.1} parent=31 // pred_check
          %p187 = pneg %p54
        $region34: #{highway_apply.1} parent=31 // pred_check_branch
          %189 = sbr.rel (%p187) target = $region36
        $region35: #{highway_apply.1} parent=31 // pred_region
          %190 = dma.done %s183, 128
        $region36: #{highway_apply.1} parent=31 // pred_fallthru
          _
        // Predicated region
        $region37: #{highway_apply.1} parent=31 // pred_check
          %p191 = pneg %p75
        $region38: #{highway_apply.1} parent=31 // pred_check_branch
          %193 = sbr.rel (%p191) target = $region40
        $region39: #{highway_apply.1} parent=31 // pred_region
          %194 = dma.done [#allocation7], 4096
        $region40: #{highway_apply.1} parent=31 // pred_fallthru
          _
        %s195 = sand.u32 %s41, 1
        %s196 = scalar_lea.sflag [#allocation4], %s195
        %s197 = sand.u32 %s41, 1
        %s198 = smul.addr %s197, 8
        %s199 = scalar_lea.vmem [#allocation3], %s198
        %p200 = pneg %p54
        %p201 = pneg %p51
        %p202 = pneg %p75
        %p203 = pneg %p72
        %p204 = pneg %p96
        %p205 = pneg %p93
        %p206 = pneg %p122
        %p207 = pneg %p119
        %s208 = sand.u32 %s109, 1
        %s209 = scalar_lea.sflag [#allocation5], %s208
        %s210 = sand.u32 %s109, 1
        %s211 = smul.addr %s210, 8
        %s212 = scalar_lea.vmem [#allocation8], %s211
        %p214 = scmp.eq.s32.totalorder %s26, 0
        // Predicated region
        $region41: #{highway_apply.1} parent=31 // pred_check
          %p215 = pneg %p214
        $region42: #{highway_apply.1} parent=31 // pred_check_branch
          %217 = sbr.rel (%p215) target = $region44
        $region43: #{highway_apply.1} parent=31 // pred_region
          %v218 = vld [vmem:[%s186] sm:$0xff]
          %219 = vst [vmem:[#allocation2] sm:$0xff] %v218
        $region44: #{highway_apply.1} parent=31 // pred_fallthru
          _
        %v220 = vld [vmem:[#allocation2] sm:$0xff]
        %s221 = smul.u32 %s26, 32
        %s222 = smul.addr %s221, 4
        %s223 = scalar_lea.vmem [#allocation6], %s222
        %v224 = vld [vmem:[%s223] sm:$0xff]
        %v225 = vld [vmem:[%s223 + $0x8] sm:$0xff]
        %v226 = vld [vmem:[%s223 + $0x10] sm:$0xff]
        %v227 = vld [vmem:[%s223 + $0x18] sm:$0xff]
        %v228 = vld [vmem:[%s223 + $0x20] sm:$0xff]
        %v229 = vld [vmem:[%s223 + $0x28] sm:$0xff]
        %v230 = vld [vmem:[%s223 + $0x30] sm:$0xff]
        %v231 = vld [vmem:[%s223 + $0x38] sm:$0xff]
        %v232 = vld [vmem:[%s223 + $0x40] sm:$0xff]
        %v233 = vld [vmem:[%s223 + $0x48] sm:$0xff]
        %v234 = vld [vmem:[%s223 + $0x50] sm:$0xff]
        %v235 = vld [vmem:[%s223 + $0x58] sm:$0xff]
        %v236 = vld [vmem:[%s223 + $0x60] sm:$0xff]
        %v237 = vld [vmem:[%s223 + $0x68] sm:$0xff]
        %v238 = vld [vmem:[%s223 + $0x70] sm:$0xff]
        %v239 = vld [vmem:[%s223 + $0x78] sm:$0xff]
        %s240 = smul.u32 %s26, 2
        %s241 = scalar_lea.vmem %s2, %s240
        %v242 = vld [vmem:[%s241] sm:$0x3]
        %v243 = vpack.c.bf16 %v220, %v220
        %v245 = vlaneseq
        %v246 = vshrl.u32 %v245, 7
        %v247 = vsub.s32 0, %v246
        %v248 = vrot.slane %v242, %v247
        %v249 = vlaneseq
        %v250 = vshrl.u32 %v249, 7
        %v251 = vsub.s32 1, %v250
        %v252 = vrot.slane %v242, %v251
        %v271 = vunpack.c.l.b16 %v224
        %v272 = vunpack.c.h.b16 %v224
        %v273 = vunpack.c.l.b16 %v225
        %v274 = vunpack.c.h.b16 %v225
        %v275 = vunpack.c.l.b16 %v226
        %v276 = vunpack.c.h.b16 %v226
        %v277 = vunpack.c.l.b16 %v227
        %v278 = vunpack.c.h.b16 %v227
        %v279 = vunpack.c.l.b16 %v228
        %v280 = vunpack.c.h.b16 %v228
        %v281 = vunpack.c.l.b16 %v229
        %v282 = vunpack.c.h.b16 %v229
        %v283 = vunpack.c.l.b16 %v230
        %v284 = vunpack.c.h.b16 %v230
        %v285 = vunpack.c.l.b16 %v231
        %v286 = vunpack.c.h.b16 %v231
        %v287 = vunpack.c.l.b16 %v232
        %v288 = vunpack.c.h.b16 %v232
        %v289 = vunpack.c.l.b16 %v233
        %v290 = vunpack.c.h.b16 %v233
        %v291 = vunpack.c.l.b16 %v234
        %v292 = vunpack.c.h.b16 %v234
        %v293 = vunpack.c.l.b16 %v235
        %v294 = vunpack.c.h.b16 %v235
        %v295 = vunpack.c.l.b16 %v236
        %v296 = vunpack.c.h.b16 %v236
        %v297 = vunpack.c.l.b16 %v237
        %v298 = vunpack.c.h.b16 %v237
        %v299 = vunpack.c.l.b16 %v238
        %v300 = vunpack.c.h.b16 %v238
        %v301 = vunpack.c.l.b16 %v239
        %v302 = vunpack.c.h.b16 %v239
        %v303 = vpack.c.b16 %v273, %v271
        %v304 = vpack.c.b16 %v274, %v272
        %v305 = vpack.c.b16 %v277, %v275
        %v306 = vpack.c.b16 %v278, %v276
        %v307 = vpack.c.b16 %v281, %v279
        %v308 = vpack.c.b16 %v282, %v280
        %v309 = vpack.c.b16 %v285, %v283
        %v310 = vpack.c.b16 %v286, %v284
        %v311 = vpack.c.b16 %v289, %v287
        %v312 = vpack.c.b16 %v290, %v288
        %v313 = vpack.c.b16 %v293, %v291
        %v314 = vpack.c.b16 %v294, %v292
        %v315 = vpack.c.b16 %v297, %v295
        %v316 = vpack.c.b16 %v298, %v296
        %v317 = vpack.c.b16 %v301, %v299
        %v318 = vpack.c.b16 %v302, %v300
        %335 = vmatprep.subr.bf16.mxu0 %v304
        %336 = vmatpush1.bf16.msra.mxu0 %v303
        %337 = vmatprep.subr.bf16.mxu0 %v306
        %338 = vmatpush1.bf16.msra.mxu0 %v305
        %339 = vmatprep.subr.bf16.mxu0 %v308
        %340 = vmatpush1.bf16.msra.mxu0 %v307
        %341 = vmatprep.subr.bf16.mxu0 %v310
        %342 = vmatpush1.bf16.msra.mxu0 %v309
        %343 = vmatprep.subr.bf16.mxu0 %v312
        %344 = vmatpush1.bf16.msra.mxu0 %v311
        %345 = vmatprep.subr.bf16.mxu0 %v314
        %346 = vmatpush1.bf16.msra.mxu0 %v313
        %347 = vmatprep.subr.bf16.mxu0 %v316
        %348 = vmatpush1.bf16.msra.mxu0 %v315
        %349 = vmatprep.subr.bf16.mxu0 %v318
        %350 = vmatpush1.bf16.msra.mxu0 %v317
        %351 = vmatprep.subr.bf16.mxu0 0
        %352 = vmatpush1.bf16.msra.mxu0 0
        %353 = vmatprep.subr.bf16.mxu0 0
        %354 = vmatpush1.bf16.msra.mxu0 0
        %355 = vmatprep.subr.bf16.mxu0 0
        %356 = vmatpush1.bf16.msra.mxu0 0
        %357 = vmatprep.subr.bf16.mxu0 0
        %358 = vmatpush1.bf16.msra.mxu0 0
        %359 = vmatprep.subr.bf16.mxu0 0
        %360 = vmatpush1.bf16.msra.mxu0 0
        %361 = vmatprep.subr.bf16.mxu0 0
        %362 = vmatpush1.bf16.msra.mxu0 0
        %363 = vmatprep.subr.bf16.mxu0 0
        %364 = vmatpush1.bf16.msra.mxu0 0
        %365 = vmatprep.subr.bf16.mxu0 0
        %366 = vmatpush1.bf16.msra.mxu0 0
        %367 = vmatprep.mubr.bf16.mxu0 0
        %368 = vmatmul.mubr.bf16.gmra.mrb[0].mxu0 %v243
        %v369 = vpop.f32.mrb[0].mxu0
        %v370 = vadd.f32 %v248, %v369
        %v371 = vpop.f32.mrb[0].mxu0
        %v372 = vadd.f32 %v252, %v371
        %v373 = vpop.f32.mrb[0].mxu0
        %v374 = vpop.f32.mrb[0].mxu0
        %375 = vdwg.mxu0
        %v376 = vmax.f32 %v370, 0.0
        %v377 = vmax.f32 %v372, -30.0
        %v378 = vsub.f32 0.0, %v377
        %v379 = vmul.f32 %v378, 1.442695
        %v380 = vpow.pop %v379
        %v381 = vadd.f32 %v380, 1.0
        %v382 = vrcp.pop %v381
        %v383 = vmul.f32 %v381, %v382
        %v384 = vsub.f32 2.0, %v383
        %v385 = vmul.f32 %v382, %v384
        %v386 = vsub.f32 %v220, %v376
        %v387 = vmul.f32 %v385, %v386
        %v388 = vadd.f32 %v376, %v387
        %389 = vst [vmem:[#allocation2] sm:$0xff] %v388
        %p390 = scmp.eq.s32.totalorder %s26, 1
        // Predicated region
        $region45: #{highway_apply.1} parent=31 // pred_check
          %p391 = pneg %p390
        $region46: #{highway_apply.1} parent=31 // pred_check_branch
          %393 = sbr.rel (%p391) target = $region48
        $region47: #{highway_apply.1} parent=31 // pred_region
          %v394 = vld [vmem:[#allocation2] sm:$0xff]
          %395 = vst [vmem:[%s212] sm:$0xff] %v394
        $region48: #{highway_apply.1} parent=31 // pred_fallthru
          _
        %s396 = sand.u32 %s109, 1
        %s397 = scalar_lea.sflag [#allocation5], %s396
        %s398 = sand.u32 %s109, 1
        %s399 = smul.addr %s398, 8
        %s400 = scalar_lea.vmem [#allocation8], %s399
        // Predicated region
        $region49: #{highway_apply.1} parent=31 // pred_check
          %p401 = pneg %p119
        $region50: #{highway_apply.1} parent=31 // pred_check_branch
          %403 = sbr.rel (%p401) target = $region52
        $region51: #{highway_apply.1} parent=31 // pred_region
          %s405 = ssub.s32 128, 128
          %406 = vsyncadd %s397, %s405
          %s407 = smul.addr %s25, 128
          %s408 = scalar_lea.hbm %s3, %s407
          %s410 = sshll.u32 %s400, 4
          %s411 = int_to_ptr.vmem [resolvable:$true] %s410
          %413 = dma.vmem_to_hbm [thread:$0]  %s411, 128, %s408, %s397
        $region52: #{highway_apply.1} parent=31 // pred_fallthru
          _
      $region32: #{highway_apply.1} parent=5 // pred_fallthru
        _
      %p414 = scmp.le.s32.totalorder 2, %s16
      // Predicated region
      $region53: #{highway_apply.1} parent=5 // pred_check
        %p415 = pneg %p414
      $region54: #{highway_apply.1} parent=5 // pred_check_branch
        %417 = sbr.rel (%p415) target = $region56
      $region55: #{highway_apply.1} parent=5 // pred_region
        %s418 = ssub.s32 %s16, 2
        // Predicated region
        $region57: #{highway_apply.1} parent=55 // pred_check
          %p419 = pneg %p125
        $region58: #{highway_apply.1} parent=55 // pred_check_branch
          %421 = sbr.rel (%p419) target = $region60
        $region59: #{highway_apply.1} parent=55 // pred_region
          %s422 = sand.u32 %s110, 1
          %s423 = scalar_lea.sflag [#allocation5], %s422
          %s424 = sand.u32 %s110, 1
          %s425 = smul.addr %s424, 8
          %s426 = scalar_lea.vmem [#allocation8], %s425
          %427 = dma.done %s423, 128
        $region60: #{highway_apply.1} parent=55 // pred_fallthru
          _
      $region56: #{highway_apply.1} parent=5 // pred_fallthru
        _
    $region6: #{highway_apply.1} parent=1 // loop_footer
      %s20 = sadd.s32 1, %s16
    $region7: #{highway_apply.1} parent=1 // loop_footer_branch
      %15 = sbr.rel target = $region3
    $region8: #{highway_apply.1} parent=1 // loop_exit
      _
    %428 = vsyncpa [#allocation4], 1
    %s429 = scalar_lea.sflag [#allocation4], 1
    %430 = vsyncpa %s429, 1
    %431 = vsyncpa [#allocation7], 1
    %432 = vsyncpa [#allocation5], 1
    %s433 = scalar_lea.sflag [#allocation5], 1
    %434 = vsyncpa %s433, 1

</llo_original>
